<compile_context>
chip_gen: v7x
topology: tpu7x:2x2x1
jax: 0.10.0
libtpu: 0.0.40
codegen_flags: <defaults>
</compile_context>

<pallas_src>
import functools

import jax
import jax.numpy as jnp
import numpy as np
from jax.experimental import pallas as pl
from jax.experimental.pallas import tpu as pltpu


def _round_up(x, n):
    return ((x + n - 1) // n) * n


def _make_cosface_kernel(s, m, tile_c, mxu_dtype):
    s = float(s)
    m = float(m)

    def kernel(x_ref, w_ref, label_ref, o_ref):
        # x_ref:     (tb, D)  f32  embedding block
        # w_ref:     (tc, D)  f32  weight rows, native (C, D) layout
        # label_ref: (tb, 1)  i32  labels (-1 == no margin)
        # o_ref:     (tb, tc) f32  output logits tile
        x = x_ref[...]
        w = w_ref[...]

        # Inverse L2 norms via rsqrt (F.normalize clamps the *norm* at 1e-12,
        # i.e. the squared norm at 1e-24).  No divides anywhere.
        inv_xn = jax.lax.rsqrt(
            jnp.maximum(jnp.sum(x * x, axis=-1, keepdims=True), 1e-24))
        inv_wn = jax.lax.rsqrt(
            jnp.maximum(jnp.sum(w * w, axis=-1, keepdims=True), 1e-24))

        # Scale the weight operand (lane-broadcast of the (tc, 1) column, no
        # relayout), cast both MXU operands, and contract the shared D axis
        # directly — no transposed weight copy is ever materialized.
        w_n = (w * inv_wn).astype(mxu_dtype)
        x_c = x.astype(mxu_dtype)
        raw = jax.lax.dot_general(
            x_c, w_n,
            dimension_numbers=(((1,), (1,)), ((), ())),
            preferred_element_type=jnp.float32)            # (tb, tc) f32

        cosine = raw * inv_xn                              # post-scale x norm

        # CosFace additive margin: subtract m on the label column.  label==-1
        # never matches a non-negative class index -> no margin for that row
        # (matches the torch index/scatter path).
        ci = pl.program_id(0)
        col = ci * tile_c + jax.lax.broadcasted_iota(jnp.int32, cosine.shape, 1)
        hit = col == label_ref[...]
        o_ref[...] = (jnp.where(hit, cosine - m, cosine) * s).astype(o_ref.dtype)

    return kernel


@functools.partial(
    jax.jit, static_argnames=("s", "m", "tile_c", "tile_b", "mxu_dtype"))
def cosface_forward(embedd, weight, label, *, s=64.0, m=0.4,
                    tile_c=512, tile_b=256, mxu_dtype=jnp.bfloat16):
    """embedd: (B, D) f32, weight: (C, D) f32, label: (B,) int32 -> (B, C) f32."""
    B, D = embedd.shape
    C, D2 = weight.shape
    assert D == D2, "embedding dim mismatch"

    tile_b = min(tile_b, _round_up(B, 8))
    tile_c = min(tile_c, _round_up(C, 128))
    assert tile_b % 8 == 0 and tile_c % 128 == 0

    B_pad = _round_up(B, tile_b)
    C_pad = _round_up(C, tile_c)

    if B_pad != B:
        embedd = jnp.pad(embedd, ((0, B_pad - B), (0, 0)))
        label = jnp.pad(label, (0, B_pad - B), constant_values=-1)
    if C_pad != C:
        # NOTE: prefer C % tile_c == 0 (or a pre-padded parameter) so this
        # extra HBM copy of the weight is never taken in steady state.
        weight = jnp.pad(weight, ((0, C_pad - C), (0, 0)))

    label2d = label.reshape(B_pad, 1).astype(jnp.int32)

    kernel = _make_cosface_kernel(s, m, tile_c, mxu_dtype)

    # Class axis outermost -> each weight tile is fetched from HBM exactly
    # once; the (small) embedding/label/output blocks change every step.
    grid = (C_pad // tile_c, B_pad // tile_b)

    # Double-buffered block footprint; keep well under v7x's 64 MiB VMEM while
    # still raising the scoped default (16 MiB on v5e) for large tiles.
    block_bytes = 4 * (tile_b * D + tile_c * D + tile_b * tile_c + tile_b)
    vmem_limit = int(min(max(4 * block_bytes, 16 * 1024 * 1024),
                         48 * 1024 * 1024))

    out = pl.pallas_call(
        kernel,
        out_shape=jax.ShapeDtypeStruct((B_pad, C_pad), jnp.float32),
        grid_spec=pltpu.PrefetchScalarGridSpec(
            num_scalar_prefetch=0,
            grid=grid,
            in_specs=[
                pl.BlockSpec((tile_b, D), lambda ci, bi: (bi, 0)),   # embedd
                pl.BlockSpec((tile_c, D), lambda ci, bi: (ci, 0)),   # weight
                pl.BlockSpec((tile_b, 1), lambda ci, bi: (bi, 0)),   # labels
            ],
            out_specs=pl.BlockSpec((tile_b, tile_c), lambda ci, bi: (bi, ci)),
        ),
        compiler_params=pltpu.CompilerParams(
            dimension_semantics=("parallel", "parallel"),
            vmem_limit_bytes=vmem_limit,
        ),
    )(embedd, weight, label2d)

    return out[:B, :C]


def cosface_reference(embedd, weight, label, *, s=64.0, m=0.4):
    """Pure-JAX reference mirroring the PyTorch module."""
    x_n = embedd / jnp.maximum(
        jnp.linalg.norm(embedd, axis=1, keepdims=True), 1e-12)
    w_n = weight / jnp.maximum(
        jnp.linalg.norm(weight, axis=1, keepdims=True), 1e-12)
    cosine = x_n @ w_n.T
    cols = jnp.arange(cosine.shape[1])[None, :]
    m_hot = jnp.where((cols == label[:, None]) & (label[:, None] != -1), m, 0.0)
    return (cosine - m_hot) * s


if __name__ == "__main__":
    # Module shapes: inplane (embedding dim), outplane (num classes)
    B, inplane, outplane = 8, 32, 1024
    s, m = 64.0, 0.4   # module defaults

    key = jax.random.PRNGKey(0)
    k_emb, k_w, k_lbl = jax.random.split(key, 3)

    embedd = jax.random.normal(k_emb, (B, inplane), dtype=jnp.float32)

    # nn.init.xavier_uniform_ on weight of shape (outplane, inplane)
    bound = float(np.sqrt(6.0 / (inplane + outplane)))
    weight = jax.random.uniform(
        k_w, (outplane, inplane), dtype=jnp.float32, minval=-bound, maxval=bound)

    label = jax.random.randint(k_lbl, (B,), 0, outplane, dtype=jnp.int32)
    label = label.at[1].set(-1)   # include an "ignore" row, like the torch path

    ref = cosface_reference(embedd, weight, label, s=s, m=m)

    # f32-MXU path: tight numerical check against the reference.
    out_f32 = jax.block_until_ready(
        cosface_forward(embedd, weight, label, s=s, m=m, mxu_dtype=jnp.float32))
    np.testing.assert_allclose(np.asarray(out_f32), np.asarray(ref),
                               rtol=1e-4, atol=2e-3)

    # Default bf16-MXU path (f32 accumulation, f32 epilogue): loose check.
    out_bf16 = jax.block_until_ready(
        cosface_forward(embedd, weight, label, s=s, m=m))
    np.testing.assert_allclose(np.asarray(out_bf16), np.asarray(ref),
                               rtol=2e-2, atol=0.5)

    print("KERNEL_OK")
</pallas_src>

<mosaic_0001>
module attributes {stable_mosaic.version = 11 : i64} {
  func.func @kernel(%arg0: i32, %arg1: i32, %arg2: memref<8x32xf32, #tpu.memory_space<vmem>>, %arg3: memref<512x32xf32, #tpu.memory_space<vmem>>, %arg4: memref<8x1xi32, #tpu.memory_space<vmem>>, %arg5: memref<8x512xf32, #tpu.memory_space<vmem>>) attributes {dimension_semantics = [#tpu.dimension_semantics<parallel>, #tpu.dimension_semantics<parallel>], iteration_bounds = array<i64: 2, 1>, scalar_prefetch = 0 : i64, scratch_operands = 0 : i64, tpu.core_type = #tpu.core_type<tc>, window_params = [{transform_indices = @transform_0, window_bounds = array<i64: 8, 32>}, {transform_indices = @transform_1, window_bounds = array<i64: 512, 32>}, {transform_indices = @transform_2, window_bounds = array<i64: 8, 1>}, {transform_indices = @transform_3, window_bounds = array<i64: 8, 512>}]} {
    %c0 = arith.constant 0 : index
    %c0_0 = arith.constant 0 : index
    %0 = vector.load %arg2[%c0, %c0_0] : memref<8x32xf32, #tpu.memory_space<vmem>>, vector<8x32xf32>
    %c0_1 = arith.constant 0 : index
    %c0_2 = arith.constant 0 : index
    %1 = vector.load %arg3[%c0_1, %c0_2] : memref<512x32xf32, #tpu.memory_space<vmem>>, vector<512x32xf32>
    %2 = arith.mulf %0, %0 : vector<8x32xf32>
    %cst = arith.constant dense<0.000000e+00> : vector<8xf32>
    %3 = vector.multi_reduction <add>, %2, %cst [1] : vector<8x32xf32> to vector<8xf32>
    %4 = vector.shape_cast %3 : vector<8xf32> to vector<8x1xf32>
    %cst_3 = arith.constant 1.000000e-24 : f32
    %5 = vector.broadcast %cst_3 : f32 to vector<8x1xf32>
    %6 = arith.maximumf %4, %5 : vector<8x1xf32>
    %7 = math.rsqrt %6 : vector<8x1xf32>
    %8 = arith.mulf %1, %1 : vector<512x32xf32>
    %cst_4 = arith.constant dense<0.000000e+00> : vector<512xf32>
    %9 = vector.multi_reduction <add>, %8, %cst_4 [1] : vector<512x32xf32> to vector<512xf32>
    %10 = vector.shape_cast %9 : vector<512xf32> to vector<512x1xf32>
    %cst_5 = arith.constant 1.000000e-24 : f32
    %11 = vector.broadcast %cst_5 : f32 to vector<512x1xf32>
    %12 = arith.maximumf %10, %11 : vector<512x1xf32>
    %13 = math.rsqrt %12 : vector<512x1xf32>
    %14 = vector.broadcast %13 : vector<512x1xf32> to vector<512x32xf32>
    %15 = arith.mulf %1, %14 : vector<512x32xf32>
    %cst_6 = arith.constant dense<0.000000e+00> : vector<8x512xf32>
    %16 = tpu.matmul %0, %15, %cst_6 {dimension_numbers = #tpu.dot_dimension_numbers<[1], [1], [0], [0], [0, 0, 1, 0], [], []>} : vector<8x32xf32>, vector<512x32xf32>, vector<8x512xf32> -> vector<8x512xf32>
    %17 = vector.broadcast %7 : vector<8x1xf32> to vector<8x512xf32>
    %18 = arith.mulf %16, %17 : vector<8x512xf32>
    %c512_i32 = arith.constant 512 : i32
    %19 = arith.muli %arg0, %c512_i32 : i32
    %20 = tpu.iota {dimensions = array<i32: 1>} : vector<8x512xi32>
    %21 = vector.broadcast %19 : i32 to vector<8x512xi32>
    %22 = arith.addi %21, %20 : vector<8x512xi32>
    %c0_7 = arith.constant 0 : index
    %c0_8 = arith.constant 0 : index
    %23 = vector.load %arg4[%c0_7, %c0_8] : memref<8x1xi32, #tpu.memory_space<vmem>>, vector<8x1xi32>
    %24 = vector.broadcast %23 : vector<8x1xi32> to vector<8x512xi32>
    %25 = arith.cmpi eq, %22, %24 : vector<8x512xi32>
    %cst_9 = arith.constant 4.000000e-01 : f32
    %26 = vector.broadcast %cst_9 : f32 to vector<8x512xf32>
    %27 = arith.subf %18, %26 : vector<8x512xf32>
    %28 = arith.select %25, %27, %18 : vector<8x512xi1>, vector<8x512xf32>
    %cst_10 = arith.constant 6.400000e+01 : f32
    %29 = vector.broadcast %cst_10 : f32 to vector<8x512xf32>
    %30 = arith.mulf %28, %29 : vector<8x512xf32>
    %c0_11 = arith.constant 0 : index
    %c0_12 = arith.constant 0 : index
    %31 = vector.load %arg5[%c0_11, %c0_12] : memref<8x512xf32, #tpu.memory_space<vmem>>, vector<8x512xf32>
    tpu.vector_store %arg5[%c0_11, %c0_12], %30 {strides = array<i32>} : memref<8x512xf32, #tpu.memory_space<vmem>>, vector<8x512xf32>,
    return
  }
  func.func @transform_0(%arg0: i32, %arg1: i32) -> (i32, i32) {
    %c0_i32 = arith.constant 0 : i32
    %c0_i32_0 = arith.constant 0 : i32
    return %arg1, %c0_i32 : i32, i32
  }
  func.func @transform_1(%arg0: i32, %arg1: i32) -> (i32, i32) {
    %c0_i32 = arith.constant 0 : i32
    %c0_i32_0 = arith.constant 0 : i32
    return %arg0, %c0_i32 : i32, i32
  }
  func.func @transform_2(%arg0: i32, %arg1: i32) -> (i32, i32) {
    %c0_i32 = arith.constant 0 : i32
    %c0_i32_0 = arith.constant 0 : i32
    return %arg1, %c0_i32 : i32, i32
  }
  func.func @transform_3(%arg0: i32, %arg1: i32) -> (i32, i32) {
    %c0_i32 = arith.constant 0 : i32
    return %arg1, %arg0 : i32, i32
  }
}

</mosaic_0001>

<llo_original>
// kernel: cosface_forward.1
$region0: #{cosface_forward.1}
  #allocation0 [shape = 'u32[]', space=smem, size = 0x4, offset = 0x4, fixed_abs, tag = 'smem constant byte address 0x4 - core index']
  #allocation1 [shape = 'u32[144,128]{1,0:T(1,128)}', space=vmem, size = 0x12000, scoped, tag = 'internal scratch']
  %s0 = inlined_call_operand.vmem [shape: f32[8,32], index: 0, kind: input, shape index: {}]
  %s1 = inlined_call_operand.vmem [shape: f32[1024,32], index: 1, kind: input, shape index: {}]
  %s2 = inlined_call_operand.vmem [shape: s32[8,1], index: 2, kind: input, shape index: {}]
  %s3 = inlined_call_operand.hbm [shape: f32[8,1024], index: 3, kind: output, shape index: {}]
  %s4 = sld [smem:[#allocation0]]
  $region45: #{cosface_forward.1} parent=0
    _
  %s6 = ssub.s32 1, %s4
  %s7 = scalar_select 0, %s6, %s4
  $region1: #{cosface_forward.1} parent=0
    #allocation2 [shape = 'u8[32768]{0}', space=vmem, size = 0x8000, scoped, tag = 'output window, operand 0']
    #allocation3 [shape = 's32[2]{0}', space=sflag, size = 0x8, scoped, tag = 'scoped memory for cosface_forward.1']
    %8 = vsyncpa [#allocation3], 0
    %s9 = scalar_lea.sflag [#allocation3], 1
    %10 = vsyncpa %s9, 0
    loop: start=0, step=1, limit=4
    $region2: #{cosface_forward.1} parent=1 // loop_pre_header
      _
    $region3: #{cosface_forward.1} parent=1 // loop_header
      %s12 = sphi 0, %s16
      %p13 = scmp.ge.s32.totalorder %s12, 4
      %s19 = sphi 0, %s31
      %s20 = sphi 0, %s27
      %s21 = sphi 0, %s19
      %s22 = sphi 0, %s20
      %s23 = sphi 0, %s21
      %s24 = sphi 0, %s22
      %s34 = sphi 0, %s36
      %s37 = sphi 0, %s34
      %s38 = sphi 0, %s37
      %s54 = sphi 0, %s38
      %s60 = sphi 0, %s62
      %s63 = sphi 0, %s60
      %s64 = sphi 0, %s63
      %s80 = sphi 0, %s64
      %s86 = sphi 0, %s88
      %s89 = sphi 0, %s86
      %s90 = sphi 0, %s89
      %s106 = sphi 0, %s90
      %s114 = sphi 0, %s116
      %s117 = sphi 0, %s114
      %s118 = sphi 0, %s117
      %s134 = sphi 0, %s118
    $region4: #{cosface_forward.1} parent=1 // loop_header_branch
      %15 = sbr.rel (%p13) target = $region8
    $region5: #{cosface_forward.1} parent=1 // loop_body
      %s17 = ssub.s32 %s12, 1
      %s18 = ssub.s32 %s12, 2
      %s25 = sadd.s32 1, %s20
      %p26 = scmp.ge.s32.totalorder %s25, 1
      %s27 = scalar_select %p26, 0, %s25
      %s28 = sadd.s32 1, %s19
      %s29 = scalar_select %p26, %s28, %s19
      %p30 = scmp.ge.s32.totalorder %s29, 2
      %s31 = scalar_select %p30, 0, %s29
      %s32 = ssub.s32 %s20, %s27
      %p33 = scmp.eq.s32.totalorder %s32, 0
      %s35 = sadd.s32 %s34, 1
      %s36 = scalar_select %p33, %s34, %s35
      %p39 = pneg %p33
      %p40 = scmp.eq.s32.totalorder %s12, 1
      %p41 = por %p39, %p40
      %p42 = scmp.ne.s32.totalorder %s34, %s37
      %p43 = scmp.eq.s32.totalorder %s12, 0
      %p44 = por %p42, %p43
      %p45 = scmp.ne.s32.totalorder %s34, %s37
      %p46 = scmp.eq.s32.totalorder %s17, 1
      %p47 = por %p45, %p46
      %p48 = scmp.ne.s32.totalorder %s37, %s38
      %p49 = scmp.eq.s32.totalorder %s17, 0
      %p50 = por %p48, %p49
      %p51 = scmp.ne.s32.totalorder %s37, %s38
      %p52 = scmp.eq.s32.totalorder %s18, 1
      %p53 = por %p51, %p52
      %p55 = scmp.ne.s32.totalorder %s38, %s54
      %p56 = scmp.eq.s32.totalorder %s18, 0
      %p57 = por %p55, %p56
      %s58 = ssub.s32 %s19, %s31
      %p59 = scmp.eq.s32.totalorder %s58, 0
      %s61 = sadd.s32 %s60, 1
      %s62 = scalar_select %p59, %s60, %s61
      %p65 = pneg %p59
      %p66 = scmp.eq.s32.totalorder %s12, 1
      %p67 = por %p65, %p66
      %p68 = scmp.ne.s32.totalorder %s60, %s63
      %p69 = scmp.eq.s32.totalorder %s12, 0
      %p70 = por %p68, %p69
      %p71 = scmp.ne.s32.totalorder %s60, %s63
      %p72 = scmp.eq.s32.totalorder %s17, 1
      %p73 = por %p71, %p72
      %p74 = scmp.ne.s32.totalorder %s63, %s64
      %p75 = scmp.eq.s32.totalorder %s17, 0
      %p76 = por %p74, %p75
      %p77 = scmp.ne.s32.totalorder %s63, %s64
      %p78 = scmp.eq.s32.totalorder %s18, 1
      %p79 = por %p77, %p78
      %p81 = scmp.ne.s32.totalorder %s64, %s80
      %p82 = scmp.eq.s32.totalorder %s18, 0
      %p83 = por %p81, %p82
      %s84 = ssub.s32 %s20, %s27
      %p85 = scmp.eq.s32.totalorder %s84, 0
      %s87 = sadd.s32 %s86, 1
      %s88 = scalar_select %p85, %s86, %s87
      %p91 = pneg %p85
      %p92 = scmp.eq.s32.totalorder %s12, 1
      %p93 = por %p91, %p92
      %p94 = scmp.ne.s32.totalorder %s86, %s89
      %p95 = scmp.eq.s32.totalorder %s12, 0
      %p96 = por %p94, %p95
      %p97 = scmp.ne.s32.totalorder %s86, %s89
      %p98 = scmp.eq.s32.totalorder %s17, 1
      %p99 = por %p97, %p98
      %p100 = scmp.ne.s32.totalorder %s89, %s90
      %p101 = scmp.eq.s32.totalorder %s17, 0
      %p102 = por %p100, %p101
      %p103 = scmp.ne.s32.totalorder %s89, %s90
      %p104 = scmp.eq.s32.totalorder %s18, 1
      %p105 = por %p103, %p104
      %p107 = scmp.ne.s32.totalorder %s90, %s106
      %p108 = scmp.eq.s32.totalorder %s18, 0
      %p109 = por %p107, %p108
      %s110 = ssub.s32 %s20, %s27
      %s111 = ssub.s32 %s19, %s31
      %s112 = sor.u32 %s110, %s111
      %p113 = scmp.eq.s32.totalorder %s112, 0
      %s115 = sadd.s32 %s114, 1
      %s116 = scalar_select %p113, %s114, %s115
      %p119 = pneg %p113
      %p120 = scmp.eq.s32.totalorder %s12, 1
      %p121 = por %p119, %p120
      %p122 = scmp.ne.s32.totalorder %s114, %s117
      %p123 = scmp.eq.s32.totalorder %s12, 0
      %p124 = por %p122, %p123
      %p125 = scmp.ne.s32.totalorder %s114, %s117
      %p126 = scmp.eq.s32.totalorder %s17, 1
      %p127 = por %p125, %p126
      %p128 = scmp.ne.s32.totalorder %s117, %s118
      %p129 = scmp.eq.s32.totalorder %s17, 0
      %p130 = por %p128, %p129
      %p131 = scmp.ne.s32.totalorder %s117, %s118
      %p132 = scmp.eq.s32.totalorder %s18, 1
      %p133 = por %p131, %p132
      %p135 = scmp.ne.s32.totalorder %s118, %s134
      %p136 = scmp.eq.s32.totalorder %s18, 0
      %p137 = por %p135, %p136
      %p138 = scmp.le.s32.totalorder 1, %s12
      %p139 = scmp.lt.s32.totalorder %s12, 3
      %p140 = pnand %p138, %p139
      %p141 = pneg %p140
      // Predicated region
      $region9: #{cosface_forward.1} parent=5 // pred_check
        _
      $region10: #{cosface_forward.1} parent=5 // pred_check_branch
        %143 = sbr.rel (%p140) target = $region12
      $region11: #{cosface_forward.1} parent=5 // pred_region
        %s144 = ssub.s32 %s12, 1
        // Predicated region
        $region13: #{cosface_forward.1} parent=11 // pred_check
          %p145 = pneg %p50
        $region14: #{cosface_forward.1} parent=11 // pred_check_branch
          %147 = sbr.rel (%p145) target = $region16
        $region15: #{cosface_forward.1} parent=11 // pred_region
          %p148 = scmp.lt.s32.totalorder %s22, 0
          %s149 = scalar_select %p148, %s22, 0
          %s150 = smul.addr %s149, 8
          %s151 = scalar_lea.vmem %s0, %s150
        $region16: #{cosface_forward.1} parent=11 // pred_fallthru
          _
        // Predicated region
        $region17: #{cosface_forward.1} parent=11 // pred_check
          %p152 = pneg %p102
        $region18: #{cosface_forward.1} parent=11 // pred_check_branch
          %154 = sbr.rel (%p152) target = $region20
        $region19: #{cosface_forward.1} parent=11 // pred_region
          %p155 = scmp.lt.s32.totalorder %s22, 0
          %s156 = scalar_select %p155, %s22, 0
          %s157 = smul.addr %s156, 8
          %s158 = scalar_lea.vmem %s2, %s157
        $region20: #{cosface_forward.1} parent=11 // pred_fallthru
          _
      $region12: #{cosface_forward.1} parent=5 // pred_fallthru
        _
      %p159 = scmp.lt.s32.totalorder %s12, 2
      // Predicated region
      $region21: #{cosface_forward.1} parent=5 // pred_check
        %p160 = pneg %p159
      $region22: #{cosface_forward.1} parent=5 // pred_check_branch
        %162 = sbr.rel (%p160) target = $region24
      $region23: #{cosface_forward.1} parent=5 // pred_region
        // Predicated region
        $region25: #{cosface_forward.1} parent=23 // pred_check
          %p163 = pneg %p70
        $region26: #{cosface_forward.1} parent=23 // pred_check_branch
          %165 = sbr.rel (%p163) target = $region28
        $region27: #{cosface_forward.1} parent=23 // pred_region
          %s166 = smul.u32 64, %s19
          %p167 = scmp.lt.s32.totalorder %s166, 127
          %s168 = scalar_select %p167, %s166, 127
          %s169 = smul.addr %s168, 8
          %s170 = scalar_lea.vmem %s1, %s169
          %s171 = smul.u32 64, %s19
        $region28: #{cosface_forward.1} parent=23 // pred_fallthru
          _
      $region24: #{cosface_forward.1} parent=5 // pred_fallthru
        _
      %p172 = scmp.le.s32.totalorder 1, %s12
      %p173 = scmp.lt.s32.totalorder %s12, 3
      %p174 = pnand %p172, %p173
      %p175 = pneg %p174
      // Predicated region
      $region29: #{cosface_forward.1} parent=5 // pred_check
        _
      $region30: #{cosface_forward.1} parent=5 // pred_check_branch
        %177 = sbr.rel (%p174) target = $region32
      $region31: #{cosface_forward.1} parent=5 // pred_region
        %s178 = ssub.s32 %s12, 1
        %p179 = scmp.lt.s32.totalorder %s22, 0
        %s180 = scalar_select %p179, %s22, 0
        %s181 = smul.addr %s180, 8
        %s182 = scalar_lea.vmem %s0, %s181
        %p183 = pneg %p50
        %p184 = pneg %p47
        %s185 = smul.u32 64, %s21
        %p186 = scmp.lt.s32.totalorder %s185, 127
        %s187 = scalar_select %p186, %s185, 127
        %s188 = smul.addr %s187, 8
        %s189 = scalar_lea.vmem %s1, %s188
        %p190 = pneg %p76
        %p191 = pneg %p73
        %p192 = scmp.lt.s32.totalorder %s22, 0
        %s193 = scalar_select %p192, %s22, 0
        %s194 = smul.addr %s193, 8
        %s195 = scalar_lea.vmem %s2, %s194
        %p196 = pneg %p102
        %p197 = pneg %p99
        %p198 = pneg %p130
        %p199 = pneg %p127
        %s200 = sand.u32 %s117, 1
        %s201 = scalar_lea.sflag [#allocation3], %s200
        %s202 = sand.u32 %s117, 1
        %s203 = smul.addr %s202, 32
        %s204 = scalar_lea.vmem [#allocation2], %s203
        %p205 = scmp.lt.s32.totalorder %s22, 0
        %s206 = scalar_select %p205, %s22, 0
        %s207 = smul.addr %s206, 8
        %s208 = scalar_lea.vmem %s0, %s207
        %s209 = smul.u32 64, %s21
        %p210 = scmp.lt.s32.totalorder %s209, 127
        %s211 = scalar_select %p210, %s209, 127
        %s212 = smul.addr %s211, 8
        %s213 = scalar_lea.vmem %s1, %s212
        %s214 = smul.u32 64, %s21
        %p215 = scmp.lt.s32.totalorder %s22, 0
        %s216 = scalar_select %p215, %s22, 0
        %s217 = smul.addr %s216, 8
        %s218 = scalar_lea.vmem %s2, %s217
        %s219 = smul.u32 4, %s21
        %v220 = vld [vmem:[%s208] sm:$0xff]
        %v221 = vld [vmem:[%s213] sm:$0xff]
        %v222 = vld [vmem:[%s213 + $0x8] sm:$0xff]
        %v223 = vld [vmem:[%s213 + $0x10] sm:$0xff]
        %v224 = vld [vmem:[%s213 + $0x18] sm:$0xff]
        %v225 = vld [vmem:[%s213 + $0x20] sm:$0xff]
        %v226 = vld [vmem:[%s213 + $0x28] sm:$0xff]
        %v227 = vld [vmem:[%s213 + $0x30] sm:$0xff]
        %v228 = vld [vmem:[%s213 + $0x38] sm:$0xff]
        %v229 = vld [vmem:[%s213 + $0x40] sm:$0xff]
        %v230 = vld [vmem:[%s213 + $0x48] sm:$0xff]
        %v231 = vld [vmem:[%s213 + $0x50] sm:$0xff]
        %v232 = vld [vmem:[%s213 + $0x58] sm:$0xff]
        %v233 = vld [vmem:[%s213 + $0x60] sm:$0xff]
        %v234 = vld [vmem:[%s213 + $0x68] sm:$0xff]
        %v235 = vld [vmem:[%s213 + $0x70] sm:$0xff]
        %v236 = vld [vmem:[%s213 + $0x78] sm:$0xff]
        %v237 = vld [vmem:[%s213 + $0x80] sm:$0xff]
        %v238 = vld [vmem:[%s213 + $0x88] sm:$0xff]
        %v239 = vld [vmem:[%s213 + $0x90] sm:$0xff]
        %v240 = vld [vmem:[%s213 + $0x98] sm:$0xff]
        %v241 = vld [vmem:[%s213 + $0xa0] sm:$0xff]
        %v242 = vld [vmem:[%s213 + $0xa8] sm:$0xff]
        %v243 = vld [vmem:[%s213 + $0xb0] sm:$0xff]
        %v244 = vld [vmem:[%s213 + $0xb8] sm:$0xff]
        %v245 = vld [vmem:[%s213 + $0xc0] sm:$0xff]
        %v246 = vld [vmem:[%s213 + $0xc8] sm:$0xff]
        %v247 = vld [vmem:[%s213 + $0xd0] sm:$0xff]
        %v248 = vld [vmem:[%s213 + $0xd8] sm:$0xff]
        %v249 = vld [vmem:[%s213 + $0xe0] sm:$0xff]
        %v250 = vld [vmem:[%s213 + $0xe8] sm:$0xff]
        %v251 = vld [vmem:[%s213 + $0xf0] sm:$0xff]
        %v252 = vld [vmem:[%s213 + $0xf8] sm:$0xff]
        %v253 = vld [vmem:[%s213 + $0x100] sm:$0xff]
        %v254 = vld [vmem:[%s213 + $0x108] sm:$0xff]
        %v255 = vld [vmem:[%s213 + $0x110] sm:$0xff]
        %v256 = vld [vmem:[%s213 + $0x118] sm:$0xff]
        %v257 = vld [vmem:[%s213 + $0x120] sm:$0xff]
        %v258 = vld [vmem:[%s213 + $0x128] sm:$0xff]
        %v259 = vld [vmem:[%s213 + $0x130] sm:$0xff]
        %v260 = vld [vmem:[%s213 + $0x138] sm:$0xff]
        %v261 = vld [vmem:[%s213 + $0x140] sm:$0xff]
        %v262 = vld [vmem:[%s213 + $0x148] sm:$0xff]
        %v263 = vld [vmem:[%s213 + $0x150] sm:$0xff]
        %v264 = vld [vmem:[%s213 + $0x158] sm:$0xff]
        %v265 = vld [vmem:[%s213 + $0x160] sm:$0xff]
        %v266 = vld [vmem:[%s213 + $0x168] sm:$0xff]
        %v267 = vld [vmem:[%s213 + $0x170] sm:$0xff]
        %v268 = vld [vmem:[%s213 + $0x178] sm:$0xff]
        %v269 = vld [vmem:[%s213 + $0x180] sm:$0xff]
        %v270 = vld [vmem:[%s213 + $0x188] sm:$0xff]
        %v271 = vld [vmem:[%s213 + $0x190] sm:$0xff]
        %v272 = vld [vmem:[%s213 + $0x198] sm:$0xff]
        %v273 = vld [vmem:[%s213 + $0x1a0] sm:$0xff]
        %v274 = vld [vmem:[%s213 + $0x1a8] sm:$0xff]
        %v275 = vld [vmem:[%s213 + $0x1b0] sm:$0xff]
        %v276 = vld [vmem:[%s213 + $0x1b8] sm:$0xff]
        %v277 = vld [vmem:[%s213 + $0x1c0] sm:$0xff]
        %v278 = vld [vmem:[%s213 + $0x1c8] sm:$0xff]
        %v279 = vld [vmem:[%s213 + $0x1d0] sm:$0xff]
        %v280 = vld [vmem:[%s213 + $0x1d8] sm:$0xff]
        %v281 = vld [vmem:[%s213 + $0x1e0] sm:$0xff]
        %v282 = vld [vmem:[%s213 + $0x1e8] sm:$0xff]
        %v283 = vld [vmem:[%s213 + $0x1f0] sm:$0xff]
        %v284 = vld [vmem:[%s213 + $0x1f8] sm:$0xff]
        %v285 = vmul.f32 %v220, %v220
        %vm286 = vcmask 261120
        %v287 = vsel %vm286, %v285, 0.0
        %288 = vadd.xlane.f32.xlu0 %v287
        %v289 = vpop.xlane.xlu0 %288
        %v290 = vmax.f32 %v289, 1e-24
        %v291 = vrsqrt.pop %v290
        %v292 = vmul.f32 %v221, %v221
        %v293 = vmul.f32 %v222, %v222
        %v294 = vmul.f32 %v223, %v223
        %v295 = vmul.f32 %v224, %v224
        %v296 = vmul.f32 %v225, %v225
        %v297 = vmul.f32 %v226, %v226
        %v298 = vmul.f32 %v227, %v227
        %v299 = vmul.f32 %v228, %v228
        %v300 = vmul.f32 %v229, %v229
        %v301 = vmul.f32 %v230, %v230
        %v302 = vmul.f32 %v231, %v231
        %v303 = vmul.f32 %v232, %v232
        %v304 = vmul.f32 %v233, %v233
        %v305 = vmul.f32 %v234, %v234
        %v306 = vmul.f32 %v235, %v235
        %v307 = vmul.f32 %v236, %v236
        %v308 = vmul.f32 %v237, %v237
        %v309 = vmul.f32 %v238, %v238
        %v310 = vmul.f32 %v239, %v239
        %v311 = vmul.f32 %v240, %v240
        %v312 = vmul.f32 %v241, %v241
        %v313 = vmul.f32 %v242, %v242
        %v314 = vmul.f32 %v243, %v243
        %v315 = vmul.f32 %v244, %v244
        %v316 = vmul.f32 %v245, %v245
        %v317 = vmul.f32 %v246, %v246
        %v318 = vmul.f32 %v247, %v247
        %v319 = vmul.f32 %v248, %v248
        %v320 = vmul.f32 %v249, %v249
        %v321 = vmul.f32 %v250, %v250
        %v322 = vmul.f32 %v251, %v251
        %v323 = vmul.f32 %v252, %v252
        %v324 = vmul.f32 %v253, %v253
        %v325 = vmul.f32 %v254, %v254
        %v326 = vmul.f32 %v255, %v255
        %v327 = vmul.f32 %v256, %v256
        %v328 = vmul.f32 %v257, %v257
        %v329 = vmul.f32 %v258, %v258
        %v330 = vmul.f32 %v259, %v259
        %v331 = vmul.f32 %v260, %v260
        %v332 = vmul.f32 %v261, %v261
        %v333 = vmul.f32 %v262, %v262
        %v334 = vmul.f32 %v263, %v263
        %v335 = vmul.f32 %v264, %v264
        %v336 = vmul.f32 %v265, %v265
        %v337 = vmul.f32 %v266, %v266
        %v338 = vmul.f32 %v267, %v267
        %v339 = vmul.f32 %v268, %v268
        %v340 = vmul.f32 %v269, %v269
        %v341 = vmul.f32 %v270, %v270
        %v342 = vmul.f32 %v271, %v271
        %v343 = vmul.f32 %v272, %v272
        %v344 = vmul.f32 %v273, %v273
        %v345 = vmul.f32 %v274, %v274
        %v346 = vmul.f32 %v275, %v275
        %v347 = vmul.f32 %v276, %v276
        %v348 = vmul.f32 %v277, %v277
        %v349 = vmul.f32 %v278, %v278
        %v350 = vmul.f32 %v279, %v279
        %v351 = vmul.f32 %v280, %v280
        %v352 = vmul.f32 %v281, %v281
        %v353 = vmul.f32 %v282, %v282
        %v354 = vmul.f32 %v283, %v283
        %v355 = vmul.f32 %v284, %v284
        %v356 = vsel %vm286, %v292, 0.0
        %357 = vadd.xlane.f32.xlu0 %v356
        %v358 = vpop.xlane.xlu0 %357
        %v359 = vsel %vm286, %v293, 0.0
        %360 = vadd.xlane.f32.xlu0 %v359
        %v361 = vpop.xlane.xlu0 %360
        %v362 = vsel %vm286, %v294, 0.0
        %363 = vadd.xlane.f32.xlu0 %v362
        %v364 = vpop.xlane.xlu0 %363
        %v365 = vsel %vm286, %v295, 0.0
        %366 = vadd.xlane.f32.xlu0 %v365
        %v367 = vpop.xlane.xlu0 %366
        %v368 = vsel %vm286, %v296, 0.0
        %369 = vadd.xlane.f32.xlu0 %v368
        %v370 = vpop.xlane.xlu0 %369
        %v371 = vsel %vm286, %v297, 0.0
        %372 = vadd.xlane.f32.xlu0 %v371
        %v373 = vpop.xlane.xlu0 %372
        %v374 = vsel %vm286, %v298, 0.0
        %375 = vadd.xlane.f32.xlu0 %v374
        %v376 = vpop.xlane.xlu0 %375
        %v377 = vsel %vm286, %v299, 0.0
        %378 = vadd.xlane.f32.xlu0 %v377
        %v379 = vpop.xlane.xlu0 %378
        %v380 = vsel %vm286, %v300, 0.0
        %381 = vadd.xlane.f32.xlu0 %v380
        %v382 = vpop.xlane.xlu0 %381
        %v383 = vsel %vm286, %v301, 0.0
        %384 = vadd.xlane.f32.xlu0 %v383
        %v385 = vpop.xlane.xlu0 %384
        %v386 = vsel %vm286, %v302, 0.0
        %387 = vadd.xlane.f32.xlu0 %v386
        %v388 = vpop.xlane.xlu0 %387
        %v389 = vsel %vm286, %v303, 0.0
        %390 = vadd.xlane.f32.xlu0 %v389
        %v391 = vpop.xlane.xlu0 %390
        %v392 = vsel %vm286, %v304, 0.0
        %393 = vadd.xlane.f32.xlu0 %v392
        %v394 = vpop.xlane.xlu0 %393
        %v395 = vsel %vm286, %v305, 0.0
        %396 = vadd.xlane.f32.xlu0 %v395
        %v397 = vpop.xlane.xlu0 %396
        %v398 = vsel %vm286, %v306, 0.0
        %399 = vadd.xlane.f32.xlu0 %v398
        %v400 = vpop.xlane.xlu0 %399
        %v401 = vsel %vm286, %v307, 0.0
        %402 = vadd.xlane.f32.xlu0 %v401
        %v403 = vpop.xlane.xlu0 %402
        %v404 = vsel %vm286, %v308, 0.0
        %405 = vadd.xlane.f32.xlu0 %v404
        %v406 = vpop.xlane.xlu0 %405
        %v407 = vsel %vm286, %v309, 0.0
        %408 = vadd.xlane.f32.xlu0 %v407
        %v409 = vpop.xlane.xlu0 %408
        %v410 = vsel %vm286, %v310, 0.0
        %411 = vadd.xlane.f32.xlu0 %v410
        %v412 = vpop.xlane.xlu0 %411
        %v413 = vsel %vm286, %v311, 0.0
        %414 = vadd.xlane.f32.xlu0 %v413
        %v415 = vpop.xlane.xlu0 %414
        %v416 = vsel %vm286, %v312, 0.0
        %417 = vadd.xlane.f32.xlu0 %v416
        %v418 = vpop.xlane.xlu0 %417
        %v419 = vsel %vm286, %v313, 0.0
        %420 = vadd.xlane.f32.xlu0 %v419
        %v421 = vpop.xlane.xlu0 %420
        %v422 = vsel %vm286, %v314, 0.0
        %423 = vadd.xlane.f32.xlu0 %v422
        %v424 = vpop.xlane.xlu0 %423
        %v425 = vsel %vm286, %v315, 0.0
        %426 = vadd.xlane.f32.xlu0 %v425
        %v427 = vpop.xlane.xlu0 %426
        %v428 = vsel %vm286, %v316, 0.0
        %429 = vadd.xlane.f32.xlu0 %v428
        %v430 = vpop.xlane.xlu0 %429
        %v431 = vsel %vm286, %v317, 0.0
        %432 = vadd.xlane.f32.xlu0 %v431
        %v433 = vpop.xlane.xlu0 %432
        %v434 = vsel %vm286, %v318, 0.0
        %435 = vadd.xlane.f32.xlu0 %v434
        %v436 = vpop.xlane.xlu0 %435
        %v437 = vsel %vm286, %v319, 0.0
        %438 = vadd.xlane.f32.xlu0 %v437
        %v439 = vpop.xlane.xlu0 %438
        %v440 = vsel %vm286, %v320, 0.0
        %441 = vadd.xlane.f32.xlu0 %v440
        %v442 = vpop.xlane.xlu0 %441
        %v443 = vsel %vm286, %v321, 0.0
        %444 = vadd.xlane.f32.xlu0 %v443
        %v445 = vpop.xlane.xlu0 %444
        %v446 = vsel %vm286, %v322, 0.0
        %447 = vadd.xlane.f32.xlu0 %v446
        %v448 = vpop.xlane.xlu0 %447
        %v449 = vsel %vm286, %v323, 0.0
        %450 = vadd.xlane.f32.xlu0 %v449
        %v451 = vpop.xlane.xlu0 %450
        %v452 = vsel %vm286, %v324, 0.0
        %453 = vadd.xlane.f32.xlu0 %v452
        %v454 = vpop.xlane.xlu0 %453
        %v455 = vsel %vm286, %v325, 0.0
        %456 = vadd.xlane.f32.xlu0 %v455
        %v457 = vpop.xlane.xlu0 %456
        %v458 = vsel %vm286, %v326, 0.0
        %459 = vadd.xlane.f32.xlu0 %v458
        %v460 = vpop.xlane.xlu0 %459
        %v461 = vsel %vm286, %v327, 0.0
        %462 = vadd.xlane.f32.xlu0 %v461
        %v463 = vpop.xlane.xlu0 %462
        %v464 = vsel %vm286, %v328, 0.0
        %465 = vadd.xlane.f32.xlu0 %v464
        %v466 = vpop.xlane.xlu0 %465
        %v467 = vsel %vm286, %v329, 0.0
        %468 = vadd.xlane.f32.xlu0 %v467
        %v469 = vpop.xlane.xlu0 %468
        %v470 = vsel %vm286, %v330, 0.0
        %471 = vadd.xlane.f32.xlu0 %v470
        %v472 = vpop.xlane.xlu0 %471
        %v473 = vsel %vm286, %v331, 0.0
        %474 = vadd.xlane.f32.xlu0 %v473
        %v475 = vpop.xlane.xlu0 %474
        %v476 = vsel %vm286, %v332, 0.0
        %477 = vadd.xlane.f32.xlu0 %v476
        %v478 = vpop.xlane.xlu0 %477
        %v479 = vsel %vm286, %v333, 0.0
        %480 = vadd.xlane.f32.xlu0 %v479
        %v481 = vpop.xlane.xlu0 %480
        %v482 = vsel %vm286, %v334, 0.0
        %483 = vadd.xlane.f32.xlu0 %v482
        %v484 = vpop.xlane.xlu0 %483
        %v485 = vsel %vm286, %v335, 0.0
        %486 = vadd.xlane.f32.xlu0 %v485
        %v487 = vpop.xlane.xlu0 %486
        %v488 = vsel %vm286, %v336, 0.0
        %489 = vadd.xlane.f32.xlu0 %v488
        %v490 = vpop.xlane.xlu0 %489
        %v491 = vsel %vm286, %v337, 0.0
        %492 = vadd.xlane.f32.xlu0 %v491
        %v493 = vpop.xlane.xlu0 %492
        %v494 = vsel %vm286, %v338, 0.0
        %495 = vadd.xlane.f32.xlu0 %v494
        %v496 = vpop.xlane.xlu0 %495
        %v497 = vsel %vm286, %v339, 0.0
        %498 = vadd.xlane.f32.xlu0 %v497
        %v499 = vpop.xlane.xlu0 %498
        %v500 = vsel %vm286, %v340, 0.0
        %501 = vadd.xlane.f32.xlu0 %v500
        %v502 = vpop.xlane.xlu0 %501
        %v503 = vsel %vm286, %v341, 0.0
        %504 = vadd.xlane.f32.xlu0 %v503
        %v505 = vpop.xlane.xlu0 %504
        %v506 = vsel %vm286, %v342, 0.0
        %507 = vadd.xlane.f32.xlu0 %v506
        %v508 = vpop.xlane.xlu0 %507
        %v509 = vsel %vm286, %v343, 0.0
        %510 = vadd.xlane.f32.xlu0 %v509
        %v511 = vpop.xlane.xlu0 %510
        %v512 = vsel %vm286, %v344, 0.0
        %513 = vadd.xlane.f32.xlu0 %v512
        %v514 = vpop.xlane.xlu0 %513
        %v515 = vsel %vm286, %v345, 0.0
        %516 = vadd.xlane.f32.xlu0 %v515
        %v517 = vpop.xlane.xlu0 %516
        %v518 = vsel %vm286, %v346, 0.0
        %519 = vadd.xlane.f32.xlu0 %v518
        %v520 = vpop.xlane.xlu0 %519
        %v521 = vsel %vm286, %v347, 0.0
        %522 = vadd.xlane.f32.xlu0 %v521
        %v523 = vpop.xlane.xlu0 %522
        %v524 = vsel %vm286, %v348, 0.0
        %525 = vadd.xlane.f32.xlu0 %v524
        %v526 = vpop.xlane.xlu0 %525
        %v527 = vsel %vm286, %v349, 0.0
        %528 = vadd.xlane.f32.xlu0 %v527
        %v529 = vpop.xlane.xlu0 %528
        %v530 = vsel %vm286, %v350, 0.0
        %531 = vadd.xlane.f32.xlu0 %v530
        %v532 = vpop.xlane.xlu0 %531
        %v533 = vsel %vm286, %v351, 0.0
        %534 = vadd.xlane.f32.xlu0 %v533
        %v535 = vpop.xlane.xlu0 %534
        %v536 = vsel %vm286, %v352, 0.0
        %537 = vadd.xlane.f32.xlu0 %v536
        %v538 = vpop.xlane.xlu0 %537
        %v539 = vsel %vm286, %v353, 0.0
        %540 = vadd.xlane.f32.xlu0 %v539
        %v541 = vpop.xlane.xlu0 %540
        %v542 = vsel %vm286, %v354, 0.0
        %543 = vadd.xlane.f32.xlu0 %v542
        %v544 = vpop.xlane.xlu0 %543
        %v545 = vsel %vm286, %v355, 0.0
        %546 = vadd.xlane.f32.xlu0 %v545
        %v547 = vpop.xlane.xlu0 %546
        %v548 = vmax.f32 %v358, 1e-24
        %v549 = vmax.f32 %v361, 1e-24
        %v550 = vmax.f32 %v364, 1e-24
        %v551 = vmax.f32 %v367, 1e-24
        %v552 = vmax.f32 %v370, 1e-24
        %v553 = vmax.f32 %v373, 1e-24
        %v554 = vmax.f32 %v376, 1e-24
        %v555 = vmax.f32 %v379, 1e-24
        %v556 = vmax.f32 %v382, 1e-24
        %v557 = vmax.f32 %v385, 1e-24
        %v558 = vmax.f32 %v388, 1e-24
        %v559 = vmax.f32 %v391, 1e-24
        %v560 = vmax.f32 %v394, 1e-24
        %v561 = vmax.f32 %v397, 1e-24
        %v562 = vmax.f32 %v400, 1e-24
        %v563 = vmax.f32 %v403, 1e-24
        %v564 = vmax.f32 %v406, 1e-24
        %v565 = vmax.f32 %v409, 1e-24
        %v566 = vmax.f32 %v412, 1e-24
        %v567 = vmax.f32 %v415, 1e-24
        %v568 = vmax.f32 %v418, 1e-24
        %v569 = vmax.f32 %v421, 1e-24
        %v570 = vmax.f32 %v424, 1e-24
        %v571 = vmax.f32 %v427, 1e-24
        %v572 = vmax.f32 %v430, 1e-24
        %v573 = vmax.f32 %v433, 1e-24
        %v574 = vmax.f32 %v436, 1e-24
        %v575 = vmax.f32 %v439, 1e-24
        %v576 = vmax.f32 %v442, 1e-24
        %v577 = vmax.f32 %v445, 1e-24
        %v578 = vmax.f32 %v448, 1e-24
        %v579 = vmax.f32 %v451, 1e-24
        %v580 = vmax.f32 %v454, 1e-24
        %v581 = vmax.f32 %v457, 1e-24
        %v582 = vmax.f32 %v460, 1e-24
        %v583 = vmax.f32 %v463, 1e-24
        %v584 = vmax.f32 %v466, 1e-24
        %v585 = vmax.f32 %v469, 1e-24
        %v586 = vmax.f32 %v472, 1e-24
        %v587 = vmax.f32 %v475, 1e-24
        %v588 = vmax.f32 %v478, 1e-24
        %v589 = vmax.f32 %v481, 1e-24
        %v590 = vmax.f32 %v484, 1e-24
        %v591 = vmax.f32 %v487, 1e-24
        %v592 = vmax.f32 %v490, 1e-24
        %v593 = vmax.f32 %v493, 1e-24
        %v594 = vmax.f32 %v496, 1e-24
        %v595 = vmax.f32 %v499, 1e-24
        %v596 = vmax.f32 %v502, 1e-24
        %v597 = vmax.f32 %v505, 1e-24
        %v598 = vmax.f32 %v508, 1e-24
        %v599 = vmax.f32 %v511, 1e-24
        %v600 = vmax.f32 %v514, 1e-24
        %v601 = vmax.f32 %v517, 1e-24
        %v602 = vmax.f32 %v520, 1e-24
        %v603 = vmax.f32 %v523, 1e-24
        %v604 = vmax.f32 %v526, 1e-24
        %v605 = vmax.f32 %v529, 1e-24
        %v606 = vmax.f32 %v532, 1e-24
        %v607 = vmax.f32 %v535, 1e-24
        %v608 = vmax.f32 %v538, 1e-24
        %v609 = vmax.f32 %v541, 1e-24
        %v610 = vmax.f32 %v544, 1e-24
        %v611 = vmax.f32 %v547, 1e-24
        %v612 = vrsqrt.pop %v548
        %v613 = vrsqrt.pop %v549
        %v614 = vrsqrt.pop %v550
        %v615 = vrsqrt.pop %v551
        %v616 = vrsqrt.pop %v552
        %v617 = vrsqrt.pop %v553
        %v618 = vrsqrt.pop %v554
        %v619 = vrsqrt.pop %v555
        %v620 = vrsqrt.pop %v556
        %v621 = vrsqrt.pop %v557
        %v622 = vrsqrt.pop %v558
        %v623 = vrsqrt.pop %v559
        %v624 = vrsqrt.pop %v560
        %v625 = vrsqrt.pop %v561
        %v626 = vrsqrt.pop %v562
        %v627 = vrsqrt.pop %v563
        %v628 = vrsqrt.pop %v564
        %v629 = vrsqrt.pop %v565
        %v630 = vrsqrt.pop %v566
        %v631 = vrsqrt.pop %v567
        %v632 = vrsqrt.pop %v568
        %v633 = vrsqrt.pop %v569
        %v634 = vrsqrt.pop %v570
        %v635 = vrsqrt.pop %v571
        %v636 = vrsqrt.pop %v572
        %v637 = vrsqrt.pop %v573
        %v638 = vrsqrt.pop %v574
        %v639 = vrsqrt.pop %v575
        %v640 = vrsqrt.pop %v576
        %v641 = vrsqrt.pop %v577
        %v642 = vrsqrt.pop %v578
        %v643 = vrsqrt.pop %v579
        %v644 = vrsqrt.pop %v580
        %v645 = vrsqrt.pop %v581
        %v646 = vrsqrt.pop %v582
        %v647 = vrsqrt.pop %v583
        %v648 = vrsqrt.pop %v584
        %v649 = vrsqrt.pop %v585
        %v650 = vrsqrt.pop %v586
        %v651 = vrsqrt.pop %v587
        %v652 = vrsqrt.pop %v588
        %v653 = vrsqrt.pop %v589
        %v654 = vrsqrt.pop %v590
        %v655 = vrsqrt.pop %v591
        %v656 = vrsqrt.pop %v592
        %v657 = vrsqrt.pop %v593
        %v658 = vrsqrt.pop %v594
        %v659 = vrsqrt.pop %v595
        %v660 = vrsqrt.pop %v596
        %v661 = vrsqrt.pop %v597
        %v662 = vrsqrt.pop %v598
        %v663 = vrsqrt.pop %v599
        %v664 = vrsqrt.pop %v600
        %v665 = vrsqrt.pop %v601
        %v666 = vrsqrt.pop %v602
        %v667 = vrsqrt.pop %v603
        %v668 = vrsqrt.pop %v604
        %v669 = vrsqrt.pop %v605
        %v670 = vrsqrt.pop %v606
        %v671 = vrsqrt.pop %v607
        %v672 = vrsqrt.pop %v608
        %v673 = vrsqrt.pop %v609
        %v674 = vrsqrt.pop %v610
        %v675 = vrsqrt.pop %v611
        %v676 = vmul.f32 %v221, %v612
        %v677 = vmul.f32 %v222, %v613
        %v678 = vmul.f32 %v223, %v614
        %v679 = vmul.f32 %v224, %v615
        %v680 = vmul.f32 %v225, %v616
        %v681 = vmul.f32 %v226, %v617
        %v682 = vmul.f32 %v227, %v618
        %v683 = vmul.f32 %v228, %v619
        %v684 = vmul.f32 %v229, %v620
        %v685 = vmul.f32 %v230, %v621
        %v686 = vmul.f32 %v231, %v622
        %v687 = vmul.f32 %v232, %v623
        %v688 = vmul.f32 %v233, %v624
        %v689 = vmul.f32 %v234, %v625
        %v690 = vmul.f32 %v235, %v626
        %v691 = vmul.f32 %v236, %v627
        %v692 = vmul.f32 %v237, %v628
        %v693 = vmul.f32 %v238, %v629
        %v694 = vmul.f32 %v239, %v630
        %v695 = vmul.f32 %v240, %v631
        %v696 = vmul.f32 %v241, %v632
        %v697 = vmul.f32 %v242, %v633
        %v698 = vmul.f32 %v243, %v634
        %v699 = vmul.f32 %v244, %v635
        %v700 = vmul.f32 %v245, %v636
        %v701 = vmul.f32 %v246, %v637
        %v702 = vmul.f32 %v247, %v638
        %v703 = vmul.f32 %v248, %v639
        %v704 = vmul.f32 %v249, %v640
        %v705 = vmul.f32 %v250, %v641
        %v706 = vmul.f32 %v251, %v642
        %v707 = vmul.f32 %v252, %v643
        %v708 = vmul.f32 %v253, %v644
        %v709 = vmul.f32 %v254, %v645
        %v710 = vmul.f32 %v255, %v646
        %v711 = vmul.f32 %v256, %v647
        %v712 = vmul.f32 %v257, %v648
        %v713 = vmul.f32 %v258, %v649
        %v714 = vmul.f32 %v259, %v650
        %v715 = vmul.f32 %v260, %v651
        %v716 = vmul.f32 %v261, %v652
        %v717 = vmul.f32 %v262, %v653
        %v718 = vmul.f32 %v263, %v654
        %v719 = vmul.f32 %v264, %v655
        %v720 = vmul.f32 %v265, %v656
        %v721 = vmul.f32 %v266, %v657
        %v722 = vmul.f32 %v267, %v658
        %v723 = vmul.f32 %v268, %v659
        %v724 = vmul.f32 %v269, %v660
        %v725 = vmul.f32 %v270, %v661
        %v726 = vmul.f32 %v271, %v662
        %v727 = vmul.f32 %v272, %v663
        %v728 = vmul.f32 %v273, %v664
        %v729 = vmul.f32 %v274, %v665
        %v730 = vmul.f32 %v275, %v666
        %v731 = vmul.f32 %v276, %v667
        %v732 = vmul.f32 %v277, %v668
        %v733 = vmul.f32 %v278, %v669
        %v734 = vmul.f32 %v279, %v670
        %v735 = vmul.f32 %v280, %v671
        %v736 = vmul.f32 %v281, %v672
        %v737 = vmul.f32 %v282, %v673
        %v738 = vmul.f32 %v283, %v674
        %v739 = vmul.f32 %v284, %v675
        %v741 = vsel %vm286, %v220, 0
        %v744 = vsel %vm286, %v676, 0
        %v747 = vsel %vm286, %v677, 0
        %v750 = vsel %vm286, %v678, 0
        %v753 = vsel %vm286, %v679, 0
        %v756 = vsel %vm286, %v680, 0
        %v759 = vsel %vm286, %v681, 0
        %v762 = vsel %vm286, %v682, 0
        %v765 = vsel %vm286, %v683, 0
        %v768 = vsel %vm286, %v684, 0
        %v771 = vsel %vm286, %v685, 0
        %v774 = vsel %vm286, %v686, 0
        %v777 = vsel %vm286, %v687, 0
        %v780 = vsel %vm286, %v688, 0
        %v783 = vsel %vm286, %v689, 0
        %v786 = vsel %vm286, %v690, 0
        %v789 = vsel %vm286, %v691, 0
        %v792 = vsel %vm286, %v692, 0
        %v795 = vsel %vm286, %v693, 0
        %v798 = vsel %vm286, %v694, 0
        %v801 = vsel %vm286, %v695, 0
        %v804 = vsel %vm286, %v696, 0
        %v807 = vsel %vm286, %v697, 0
        %v810 = vsel %vm286, %v698, 0
        %v813 = vsel %vm286, %v699, 0
        %v816 = vsel %vm286, %v700, 0
        %v819 = vsel %vm286, %v701, 0
        %v822 = vsel %vm286, %v702, 0
        %v825 = vsel %vm286, %v703, 0
        %v828 = vsel %vm286, %v704, 0
        %v831 = vsel %vm286, %v705, 0
        %v834 = vsel %vm286, %v706, 0
        %v837 = vsel %vm286, %v707, 0
        %v840 = vsel %vm286, %v708, 0
        %v843 = vsel %vm286, %v709, 0
        %v846 = vsel %vm286, %v710, 0
        %v849 = vsel %vm286, %v711, 0
        %v852 = vsel %vm286, %v712, 0
        %v855 = vsel %vm286, %v713, 0
        %v858 = vsel %vm286, %v714, 0
        %v861 = vsel %vm286, %v715, 0
        %v864 = vsel %vm286, %v716, 0
        %v867 = vsel %vm286, %v717, 0
        %v870 = vsel %vm286, %v718, 0
        %v873 = vsel %vm286, %v719, 0
        %v876 = vsel %vm286, %v720, 0
        %v879 = vsel %vm286, %v721, 0
        %v882 = vsel %vm286, %v722, 0
        %v885 = vsel %vm286, %v723, 0
        %v888 = vsel %vm286, %v724, 0
        %v891 = vsel %vm286, %v725, 0
        %v894 = vsel %vm286, %v726, 0
        %v897 = vsel %vm286, %v727, 0
        %v900 = vsel %vm286, %v728, 0
        %v903 = vsel %vm286, %v729, 0
        %v906 = vsel %vm286, %v730, 0
        %v909 = vsel %vm286, %v731, 0
        %v912 = vsel %vm286, %v732, 0
        %v915 = vsel %vm286, %v733, 0
        %v918 = vsel %vm286, %v734, 0
        %v921 = vsel %vm286, %v735, 0
        %v924 = vsel %vm286, %v736, 0
        %v927 = vsel %vm286, %v737, 0
        %v930 = vsel %vm286, %v738, 0
        %v933 = vsel %vm286, %v739, 0
        %935 = vmatprep.subr.mxu0 0.0
        %936 = vmatpush1.xpose.msra.mxu0 %v744
        %937 = vmatprep.subr.mxu0 0.0
        %938 = vmatpush1.xpose.msra.mxu0 %v747
        %939 = vmatprep.subr.mxu0 0.0
        %940 = vmatpush1.xpose.msra.mxu0 %v750
        %941 = vmatprep.subr.mxu0 0.0
        %942 = vmatpush1.xpose.msra.mxu0 %v753
        %943 = vmatprep.subr.mxu0 0.0
        %944 = vmatpush1.xpose.msra.mxu0 %v756
        %945 = vmatprep.subr.mxu0 0.0
        %946 = vmatpush1.xpose.msra.mxu0 %v759
        %947 = vmatprep.subr.mxu0 0.0
        %948 = vmatpush1.xpose.msra.mxu0 %v762
        %949 = vmatprep.subr.mxu0 0.0
        %950 = vmatpush1.xpose.msra.mxu0 %v765
        %951 = vmatprep.subr.mxu0 0.0
        %952 = vmatpush1.xpose.msra.mxu0 %v768
        %953 = vmatprep.subr.mxu0 0.0
        %954 = vmatpush1.xpose.msra.mxu0 %v771
        %955 = vmatprep.subr.mxu0 0.0
        %956 = vmatpush1.xpose.msra.mxu0 %v774
        %957 = vmatprep.subr.mxu0 0.0
        %958 = vmatpush1.xpose.msra.mxu0 %v777
        %959 = vmatprep.subr.mxu0 0.0
        %960 = vmatpush1.xpose.msra.mxu0 %v780
        %961 = vmatprep.subr.mxu0 0.0
        %962 = vmatpush1.xpose.msra.mxu0 %v783
        %963 = vmatprep.subr.mxu0 0.0
        %964 = vmatpush1.xpose.msra.mxu0 %v786
        %965 = vmatprep.subr.mxu0 0.0
        %966 = vmatpush1.xpose.msra.mxu0 %v789
        %967 = vmatprep.subr.mxu0 0.0
        %968 = vmatpush1.xpose.msra.mxu0 %v792
        %969 = vmatprep.subr.mxu0 0.0
        %970 = vmatpush1.xpose.msra.mxu0 %v795
        %971 = vmatprep.subr.mxu0 0.0
        %972 = vmatpush1.xpose.msra.mxu0 %v798
        %973 = vmatprep.subr.mxu0 0.0
        %974 = vmatpush1.xpose.msra.mxu0 %v801
        %975 = vmatprep.subr.mxu0 0.0
        %976 = vmatpush1.xpose.msra.mxu0 %v804
        %977 = vmatprep.subr.mxu0 0.0
        %978 = vmatpush1.xpose.msra.mxu0 %v807
        %979 = vmatprep.subr.mxu0 0.0
        %980 = vmatpush1.xpose.msra.mxu0 %v810
        %981 = vmatprep.subr.mxu0 0.0
        %982 = vmatpush1.xpose.msra.mxu0 %v813
        %983 = vmatprep.subr.mxu0 0.0
        %984 = vmatpush1.xpose.msra.mxu0 %v816
        %985 = vmatprep.subr.mxu0 0.0
        %986 = vmatpush1.xpose.msra.mxu0 %v819
        %987 = vmatprep.subr.mxu0 0.0
        %988 = vmatpush1.xpose.msra.mxu0 %v822
        %989 = vmatprep.subr.mxu0 0.0
        %990 = vmatpush1.xpose.msra.mxu0 %v825
        %991 = vmatprep.subr.mxu0 0.0
        %992 = vmatpush1.xpose.msra.mxu0 %v828
        %993 = vmatprep.subr.mxu0 0.0
        %994 = vmatpush1.xpose.msra.mxu0 %v831
        %995 = vmatprep.subr.mxu0 0.0
        %996 = vmatpush1.xpose.msra.mxu0 %v834
        %997 = vmatprep.subr.mxu0 0.0
        %998 = vmatpush1.xpose.msra.mxu0 %v837
        %999 = vmatprep.mubr.f32.mxu0 0.0
        %1000 = vmatmul.mubr.f32.gmra.mrb[0].mxu0 %v741
        %v1001 = vpop.f32.mrb[0].mxu0
        %v1002 = vadd.f32 0.0, %v1001
        %v1003 = vpop.f32.mrb[0].mxu0
        %v1004 = vadd.f32 0.0, %v1003
        %1005 = vdwg.mxu0
        %1006 = vmatprep.subr.mxu0 0.0
        %1007 = vmatpush1.xpose.msra.mxu0 %v840
        %1008 = vmatprep.subr.mxu0 0.0
        %1009 = vmatpush1.xpose.msra.mxu0 %v843
        %1010 = vmatprep.subr.mxu0 0.0
        %1011 = vmatpush1.xpose.msra.mxu0 %v846
        %1012 = vmatprep.subr.mxu0 0.0
        %1013 = vmatpush1.xpose.msra.mxu0 %v849
        %1014 = vmatprep.subr.mxu0 0.0
        %1015 = vmatpush1.xpose.msra.mxu0 %v852
        %1016 = vmatprep.subr.mxu0 0.0
        %1017 = vmatpush1.xpose.msra.mxu0 %v855
        %1018 = vmatprep.subr.mxu0 0.0
        %1019 = vmatpush1.xpose.msra.mxu0 %v858
        %1020 = vmatprep.subr.mxu0 0.0
        %1021 = vmatpush1.xpose.msra.mxu0 %v861
        %1022 = vmatprep.subr.mxu0 0.0
        %1023 = vmatpush1.xpose.msra.mxu0 %v864
        %1024 = vmatprep.subr.mxu0 0.0
        %1025 = vmatpush1.xpose.msra.mxu0 %v867
        %1026 = vmatprep.subr.mxu0 0.0
        %1027 = vmatpush1.xpose.msra.mxu0 %v870
        %1028 = vmatprep.subr.mxu0 0.0
        %1029 = vmatpush1.xpose.msra.mxu0 %v873
        %1030 = vmatprep.subr.mxu0 0.0
        %1031 = vmatpush1.xpose.msra.mxu0 %v876
        %1032 = vmatprep.subr.mxu0 0.0
        %1033 = vmatpush1.xpose.msra.mxu0 %v879
        %1034 = vmatprep.subr.mxu0 0.0
        %1035 = vmatpush1.xpose.msra.mxu0 %v882
        %1036 = vmatprep.subr.mxu0 0.0
        %1037 = vmatpush1.xpose.msra.mxu0 %v885
        %1038 = vmatprep.subr.mxu0 0.0
        %1039 = vmatpush1.xpose.msra.mxu0 %v888
        %1040 = vmatprep.subr.mxu0 0.0
        %1041 = vmatpush1.xpose.msra.mxu0 %v891
        %1042 = vmatprep.subr.mxu0 0.0
        %1043 = vmatpush1.xpose.msra.mxu0 %v894
        %1044 = vmatprep.subr.mxu0 0.0
        %1045 = vmatpush1.xpose.msra.mxu0 %v897
        %1046 = vmatprep.subr.mxu0 0.0
        %1047 = vmatpush1.xpose.msra.mxu0 %v900
        %1048 = vmatprep.subr.mxu0 0.0
        %1049 = vmatpush1.xpose.msra.mxu0 %v903
        %1050 = vmatprep.subr.mxu0 0.0
        %1051 = vmatpush1.xpose.msra.mxu0 %v906
        %1052 = vmatprep.subr.mxu0 0.0
        %1053 = vmatpush1.xpose.msra.mxu0 %v909
        %1054 = vmatprep.subr.mxu0 0.0
        %1055 = vmatpush1.xpose.msra.mxu0 %v912
        %1056 = vmatprep.subr.mxu0 0.0
        %1057 = vmatpush1.xpose.msra.mxu0 %v915
        %1058 = vmatprep.subr.mxu0 0.0
        %1059 = vmatpush1.xpose.msra.mxu0 %v918
        %1060 = vmatprep.subr.mxu0 0.0
        %1061 = vmatpush1.xpose.msra.mxu0 %v921
        %1062 = vmatprep.subr.mxu0 0.0
        %1063 = vmatpush1.xpose.msra.mxu0 %v924
        %1064 = vmatprep.subr.mxu0 0.0
        %1065 = vmatpush1.xpose.msra.mxu0 %v927
        %1066 = vmatprep.subr.mxu0 0.0
        %1067 = vmatpush1.xpose.msra.mxu0 %v930
        %1068 = vmatprep.subr.mxu0 0.0
        %1069 = vmatpush1.xpose.msra.mxu0 %v933
        %1070 = vmatprep.mubr.f32.mxu0 0.0
        %1071 = vmatmul.mubr.f32.gmra.mrb[0].mxu0 %v741
        %v1072 = vpop.f32.mrb[0].mxu0
        %v1073 = vadd.f32 0.0, %v1072
        %v1074 = vpop.f32.mrb[0].mxu0
        %v1075 = vadd.f32 0.0, %v1074
        %1076 = vdwg.mxu0
        %v1077 = vmul.f32 %v1002, %v291
        %v1078 = vmul.f32 %v1004, %v291
        %v1079 = vmul.f32 %v1073, %v291
        %v1080 = vmul.f32 %v1075, %v291
        %s1081 = smul.u32 %s21, 512
        %v1082 = vlaneseq
        %v1083 = vand.u32 %v1082, 127
        %v1084 = vadd.s32 %v1083, 128
        %v1085 = vadd.s32 %v1083, 256
        %v1086 = vadd.s32 %v1083, 384
        %v1087 = vstv %s1081
        %v1088 = vadd.s32 %v1087, %v1083
        %v1089 = vadd.s32 %v1087, %v1084
        %v1090 = vadd.s32 %v1087, %v1085
        %v1091 = vadd.s32 %v1087, %v1086
        %v1092 = vld [vmem:[%s218] sm:$0xff]
        %1093 = vset.pattern.permute.xlu0 0
        %1094 = vperm.xlu0 %1093, %v1092
        %v1095 = vpop.permute.xlu0 %1094
        %vm1096 = vcmp.eq.s32.totalorder %v1088, %v1095
        %vm1097 = vcmp.eq.s32.totalorder %v1089, %v1095
        %vm1098 = vcmp.eq.s32.totalorder %v1090, %v1095
        %vm1099 = vcmp.eq.s32.totalorder %v1091, %v1095
        %v1100 = vsub.f32 %v1077, 0.4
        %v1101 = vsub.f32 %v1078, 0.4
        %v1102 = vsub.f32 %v1079, 0.4
        %v1103 = vsub.f32 %v1080, 0.4
        %v1104 = vsel %vm1096, %v1100, %v1077
        %v1105 = vsel %vm1097, %v1101, %v1078
        %v1106 = vsel %vm1098, %v1102, %v1079
        %v1107 = vsel %vm1099, %v1103, %v1080
        %v1108 = vmul.f32 %v1104, 64.0
        %v1109 = vmul.f32 %v1105, 64.0
        %v1110 = vmul.f32 %v1106, 64.0
        %v1111 = vmul.f32 %v1107, 64.0
        %1112 = vst [vmem:[%s204] sm:$0xff] %v1108
        %1113 = vst [vmem:[%s204 + $0x8] sm:$0xff] %v1109
        %1114 = vst [vmem:[%s204 + $0x10] sm:$0xff] %v1110
        %1115 = vst [vmem:[%s204 + $0x18] sm:$0xff] %v1111
        %s1116 = sand.u32 %s117, 1
        %s1117 = scalar_lea.sflag [#allocation3], %s1116
        %s1118 = sand.u32 %s117, 1
        %s1119 = smul.addr %s1118, 32
        %s1120 = scalar_lea.vmem [#allocation2], %s1119
        // Predicated region
        $region33: #{cosface_forward.1} parent=31 // pred_check
          %p1121 = pneg %p127
        $region34: #{cosface_forward.1} parent=31 // pred_check_branch
          %1123 = sbr.rel (%p1121) target = $region36
        $region35: #{cosface_forward.1} parent=31 // pred_region
          %s1124 = smul.u32 4, %s21
          %s1126 = ssub.s32 512, 512
          %1127 = vsyncadd %s1117, %s1126
          %s1128 = smul.addr %s22, 8
          %s1129 = sadd.s32 %s1124, %s1128
          %s1130 = smul.addr %s1129, 128
          %s1131 = scalar_lea.hbm %s3, %s1130
          %s1133 = sshll.u32 %s1120, 4
          %s1134 = int_to_ptr.vmem [resolvable:$true] %s1133
          %1136 = dma.vmem_to_hbm [thread:$0]  %s1134, 512, %s1131, %s1117
        $region36: #{cosface_forward.1} parent=31 // pred_fallthru
          _
      $region32: #{cosface_forward.1} parent=5 // pred_fallthru
        _
      %p1137 = scmp.le.s32.totalorder 2, %s12
      // Predicated region
      $region37: #{cosface_forward.1} parent=5 // pred_check
        %p1138 = pneg %p1137
      $region38: #{cosface_forward.1} parent=5 // pred_check_branch
        %1140 = sbr.rel (%p1138) target = $region40
      $region39: #{cosface_forward.1} parent=5 // pred_region
        %s1141 = ssub.s32 %s12, 2
        // Predicated region
        $region41: #{cosface_forward.1} parent=39 // pred_check
          %p1142 = pneg %p133
        $region42: #{cosface_forward.1} parent=39 // pred_check_branch
          %1144 = sbr.rel (%p1142) target = $region44
        $region43: #{cosface_forward.1} parent=39 // pred_region
          %s1145 = sand.u32 %s118, 1
          %s1146 = scalar_lea.sflag [#allocation3], %s1145
          %s1147 = sand.u32 %s118, 1
          %s1148 = smul.addr %s1147, 32
          %s1149 = scalar_lea.vmem [#allocation2], %s1148
          %1150 = dma.done %s1146, 512
        $region44: #{cosface_forward.1} parent=39 // pred_fallthru
          _
      $region40: #{cosface_forward.1} parent=5 // pred_fallthru
        _
    $region6: #{cosface_forward.1} parent=1 // loop_footer
      %s16 = sadd.s32 1, %s12
    $region7: #{cosface_forward.1} parent=1 // loop_footer_branch
      %11 = sbr.rel target = $region3
    $region8: #{cosface_forward.1} parent=1 // loop_exit
      _
    %1151 = vsyncpa [#allocation3], 1
    %s1152 = scalar_lea.sflag [#allocation3], 1
    %1153 = vsyncpa %s1152, 1

</llo_original>
